<compile_context>
chip_gen: v5e
topology: v5e:2x2
jax: 0.10.0
libtpu: 0.0.40
codegen_flags: <defaults>
</compile_context>

<pallas_src>
import functools
import math

import numpy as np
import jax
import jax.numpy as jnp
from jax.experimental import pallas as pl
from jax.experimental.pallas import tpu as pltpu


_VMEM_LIMIT = 48 * 1024 * 1024   # below v7x's 64 MiB physical, above default scoped limits
_MAX_TK = 2048                   # K-tile cap (bf16)
_COMPUTE = jnp.bfloat16          # dtype fed to the MXU / kept in HBM for activations


# ----------------------------------------------------------------------------
# helpers
# ----------------------------------------------------------------------------
def _round_up(x, m):
    return (x + m - 1) // m * m


def _pick_tk(kp, cap=_MAX_TK):
    """Largest multiple of 128 that divides kp, bounded by cap."""
    best = 128
    t = 128
    while t <= min(kp, cap):
        if kp % t == 0:
            best = t
        t += 128
    return best


def _pick_rows(batch, height, width):
    """Rows of the image processed per grid step in the row-path conv kernel."""
    r = max(1, min(height, 256 // width))
    while r > 1 and height % r:
        r -= 1
    if batch * (height // r) < 2 and r > 1:      # keep >=2 parallel blocks (v7x)
        nr = r // 2
        while nr > 1 and height % nr:
            nr -= 1
        r = max(1, nr)
    return r


def _row_tn(kp, np_):
    """Widest 128*2^k output tile whose (kp, tn) bf16 weight block stays <= 8 MiB."""
    tn = 128
    while tn * 2 <= np_ and kp * (tn * 2) * 2 <= 8 * 1024 * 1024:
        tn *= 2
    return tn


# ----------------------------------------------------------------------------
# Pallas kernels
# ----------------------------------------------------------------------------
def _epilogue(y, act):
    if act == "relu":
        return jnp.maximum(y, 0.0)
    if act == "sigmoid":
        # exp on the EUP + approximate reciprocal (also EUP), keeps the VALU free
        e = jnp.exp(-jnp.maximum(y, -30.0))
        return pl.reciprocal(1.0 + e, approx=True)
    return y


def _mm1_kernel(a_ref, b_ref, s_ref, z_ref, o_ref, *, act):
    """Single-K-block matmul: no scratch, fused BN affine + activation."""
    y = jnp.dot(a_ref[...], b_ref[...], preferred_element_type=jnp.float32)
    y = y * s_ref[...] + z_ref[...]
    o_ref[...] = _epilogue(y, act).astype(o_ref.dtype)


def _mm1_res_kernel(a_ref, b_ref, s_ref, z_ref, r_ref, o_ref, *, act):
    """Single-K-block matmul with fused residual add (bottleneck conv3)."""
    y = jnp.dot(a_ref[...], b_ref[...], preferred_element_type=jnp.float32)
    y = y * s_ref[...] + z_ref[...] + r_ref[...].astype(jnp.float32)
    o_ref[...] = _epilogue(y, act).astype(o_ref.dtype)


def _mm_kernel(a_ref, b_ref, s_ref, z_ref, o_ref, acc_ref, *, act):
    """Multi-K-block matmul with f32 scratch accumulation (no zero-init pass)."""
    k = pl.program_id(2)
    prod = jnp.dot(a_ref[...], b_ref[...], preferred_element_type=jnp.float32)

    @pl.when(k == 0)
    def _():
        acc_ref[...] = prod

    @pl.when(k > 0)
    def _():
        acc_ref[...] += prod

    @pl.when(k == pl.num_programs(2) - 1)
    def _():
        y = acc_ref[...] * s_ref[...] + z_ref[...]
        o_ref[...] = _epilogue(y, act).astype(o_ref.dtype)


def _conv3x3_row_kernel(a3_ref, w_ref, s_ref, z_ref, o_ref, *, cin, w_out, rows, act):
    """3x3 stride-1 conv: 9 tap matmuls accumulated in-register, no im2col.

    a3_ref : (3, rows, W+2, cin)  three row-shifted slabs of the padded input
    w_ref  : (Kp, tn)             packed weight, rows ordered (di, dj, c)
    o_ref  : (rows*w_out, tn)
    """
    acc = None
    for di in range(3):
        for dj in range(3):
            a = a3_ref[di, :, dj:dj + w_out, :]              # (rows, w_out, cin)
            a = a.reshape(rows * w_out, cin)
            t = di * 3 + dj
            wt = w_ref[t * cin:(t + 1) * cin, :]             # (cin, tn)
            prod = jnp.dot(a, wt, preferred_element_type=jnp.float32)
            acc = prod if acc is None else acc + prod
    y = acc * s_ref[...] + z_ref[...]
    o_ref[...] = _epilogue(y, act).astype(o_ref.dtype)


def _interp_kernel(w_ref, x_ref, o_ref, *, act):
    y = jnp.dot(w_ref[...], x_ref[...], preferred_element_type=jnp.float32)
    o_ref[...] = _epilogue(y, act).astype(o_ref.dtype)


# ----------------------------------------------------------------------------
# Pallas wrappers
# ----------------------------------------------------------------------------
def matmul_bn_act(a, b, scale, bias, residual, act, n_out):
    """act((a @ b) * scale + bias [+ residual]); bf16 MXU operands, f32 accum."""
    M, K = a.shape
    Kp, Np = b.shape

    tm = 512 if M >= 512 else _round_up(M, 8)
    Mp = _round_up(M, tm)
    if Mp <= 128 and Np >= 1024:
        tn = 512          # tiny-M weight-streaming layers: fewer, bigger steps
    elif Np % 256 == 0:
        tn = 256
    else:
        tn = 128

    a = a.astype(_COMPUTE)
    if (Mp, Kp) != (M, K):
        a = jnp.pad(a, ((0, Mp - M), (0, Kp - K)))

    multi_k = Kp > _MAX_TK
    out_shape = jax.ShapeDtypeStruct((Mp, Np), _COMPUTE)
    cparams = pltpu.CompilerParams(
        dimension_semantics=("parallel", "parallel", "arbitrary") if multi_k
        else ("parallel", "parallel"),
        vmem_limit_bytes=_VMEM_LIMIT)

    if multi_k:
        assert residual is None, "residual fusion only used on single-K layers"
        tk = _pick_tk(Kp)
        out = pl.pallas_call(
            functools.partial(_mm_kernel, act=act),
            out_shape=out_shape,
            grid_spec=pltpu.PrefetchScalarGridSpec(
                num_scalar_prefetch=0,
                grid=(Mp // tm, Np // tn, Kp // tk),
                in_specs=[
                    pl.BlockSpec((tm, tk), lambda i, j, k: (i, k)),
                    pl.BlockSpec((tk, tn), lambda i, j, k: (k, j)),
                    pl.BlockSpec((1, tn), lambda i, j, k: (0, j)),
                    pl.BlockSpec((1, tn), lambda i, j, k: (0, j)),
                ],
                out_specs=pl.BlockSpec((tm, tn), lambda i, j, k: (i, j)),
                scratch_shapes=[pltpu.VMEM((tm, tn), jnp.float32)]),
            compiler_params=cparams,
        )(a, b, scale, bias)
    else:
        in_specs = [
            pl.BlockSpec((tm, Kp), lambda i, j: (i, 0)),
            pl.BlockSpec((Kp, tn), lambda i, j: (0, j)),
            pl.BlockSpec((1, tn), lambda i, j: (0, j)),
            pl.BlockSpec((1, tn), lambda i, j: (0, j)),
        ]
        args = [a, b, scale, bias]
        if residual is None:
            kernel = functools.partial(_mm1_kernel, act=act)
        else:
            r = residual.astype(_COMPUTE)
            if r.shape != (Mp, Np):
                r = jnp.pad(r, ((0, Mp - M), (0, Np - r.shape[1])))
            in_specs.append(pl.BlockSpec((tm, tn), lambda i, j: (i, j)))
            args.append(r)
            kernel = functools.partial(_mm1_res_kernel, act=act)
        out = pl.pallas_call(
            kernel,
            out_shape=out_shape,
            grid=(Mp // tm, Np // tn),
            in_specs=in_specs,
            out_specs=pl.BlockSpec((tm, tn), lambda i, j: (i, j)),
            compiler_params=cparams,
        )(*args)
    return out[:M, :n_out]


@functools.partial(jax.jit, static_argnames=("cout", "act"))
def _conv3x3_row(x, w, scale, bias, *, cout, act):
    """Stride-1 / pad-1 3x3 conv via the row-path kernel (no HBM im2col)."""
    B, H, W, Cin = x.shape
    Wp = W + 2
    Kp, Np = w.shape
    x = x.astype(_COMPUTE)
    xp = jnp.pad(x, ((0, 0), (1, 1), (1, 1), (0, 0)))
    # 3 row-shifted slabs of the padded input: (3, B*H, W+2, Cin)
    a3 = jnp.stack([xp[:, di:di + H] for di in range(3)], axis=0)
    a3 = a3.reshape(3, B * H, Wp, Cin)

    r = _pick_rows(B, H, W)
    num_m = (B * H) // r
    tn = _row_tn(Kp, Np)
    grid = (Np // tn, num_m)

    out = pl.pallas_call(
        functools.partial(_conv3x3_row_kernel, cin=Cin, w_out=W, rows=r, act=act),
        out_shape=jax.ShapeDtypeStruct((B * H * W, Np), _COMPUTE),
        grid=grid,
        in_specs=[
            pl.BlockSpec((3, r, Wp, Cin), lambda j, m: (0, m, 0, 0)),
            pl.BlockSpec((Kp, tn), lambda j, m: (0, j)),
            pl.BlockSpec((1, tn), lambda j, m: (0, j)),
            pl.BlockSpec((1, tn), lambda j, m: (0, j)),
        ],
        out_specs=pl.BlockSpec((r * W, tn), lambda j, m: (m, j)),
        compiler_params=pltpu.CompilerParams(
            dimension_semantics=("parallel", "parallel"),
            vmem_limit_bytes=_VMEM_LIMIT),
    )(a3, w, scale, bias)
    return out[:, :cout].reshape(B, H, W, cout)


@functools.partial(jax.jit,
                   static_argnames=("kh", "kw", "cout", "stride", "padding", "act"))
def _conv_fallback(x, w, scale, bias, residual, *, kh, kw, cout, stride, padding, act):
    """1x1 convs and the remaining (stride-2 / tiny-spatial) 3x3 convs."""
    B, H, W, Cin = x.shape
    Ho = (H + 2 * padding - kh) // stride + 1
    Wo = (W + 2 * padding - kw) // stride + 1
    x = x.astype(_COMPUTE)
    if padding > 0:
        x = jnp.pad(x, ((0, 0), (padding, padding), (padding, padding), (0, 0)))
    if kh == 1 and kw == 1:
        a = x[:, ::stride, ::stride, :].reshape(B * Ho * Wo, Cin)
    else:
        # TODO(synk): im2col kept only for stride-2 / width<8 layers (tiny A
        # matrices); all large-M 3x3 convs go through _conv3x3_row instead.
        cols = [x[:, i:i + stride * Ho:stride, j:j + stride * Wo:stride, :]
                for i in range(kh) for j in range(kw)]
        a = jnp.concatenate(cols, axis=-1).reshape(B * Ho * Wo, kh * kw * Cin)
    r = None if residual is None else residual.reshape(B * Ho * Wo, cout)
    out = matmul_bn_act(a, w, scale, bias, r, act, cout)
    return out.reshape(B, Ho, Wo, cout)


def conv_bn_act(x, p, stride=1, padding=0, act="none", residual=None):
    kh, kw, cin, cout = p["kh"], p["kw"], p["cin"], p["cout"]
    W = x.shape[2]
    if (kh == 3 and kw == 3 and stride == 1 and padding == 1
            and residual is None and W % 8 == 0 and cin % 8 == 0):
        return _conv3x3_row(x, p["w"], p["scale"], p["bias"], cout=cout, act=act)
    return _conv_fallback(x, p["w"], p["scale"], p["bias"], residual,
                          kh=kh, kw=kw, cout=cout, stride=stride,
                          padding=padding, act=act)


@functools.partial(jax.jit, static_argnames=("ksize", "stride", "padding"))
def maxpool2d(x, ksize, stride, padding):
    # TODO(synk): pooling is a single fused XLA elementwise-max over strided
    # slices (~1 memory pass); a Pallas pooling kernel would need overlapping
    # (halo) blocks that Blocked BlockSpecs cannot express cleanly.
    B, H, W, C = x.shape
    Ho = (H + 2 * padding - ksize) // stride + 1
    Wo = (W + 2 * padding - ksize) // stride + 1
    if padding > 0:
        x = jnp.pad(x, ((0, 0), (padding, padding), (padding, padding), (0, 0)),
                    constant_values=-jnp.inf)
    out = None
    for i in range(ksize):
        for j in range(ksize):
            win = x[:, i:i + stride * Ho:stride, j:j + stride * Wo:stride, :]
            out = win if out is None else jnp.maximum(out, win)
    return out


def _interp_matrix(out_size, in_size, align_corners):
    Wm = np.zeros((out_size, in_size), np.float32)
    for o in range(out_size):
        if align_corners:
            src = 0.0 if out_size == 1 else o * (in_size - 1) / (out_size - 1)
        else:
            src = (o + 0.5) * (in_size / out_size) - 0.5
            src = max(src, 0.0)
        i0 = min(int(math.floor(src)), in_size - 1)
        i1 = min(i0 + 1, in_size - 1)
        frac = src - i0
        Wm[o, i0] += 1.0 - frac
        Wm[o, i1] += frac
    return Wm


def _interp_matmul(wm_np, x, act):
    """Small-K matmul with bf16 operands; full interp matrix resident in VMEM."""
    Mo, K = wm_np.shape
    _, N = x.shape
    tn = min(2048, _round_up(N, 128))
    Np = _round_up(N, tn)
    wp = jnp.asarray(wm_np, dtype=_COMPUTE)
    xp = x.astype(_COMPUTE)
    if Np != N:
        xp = jnp.pad(xp, ((0, 0), (0, Np - N)))
    out = pl.pallas_call(
        functools.partial(_interp_kernel, act=act),
        out_shape=jax.ShapeDtypeStruct((Mo, Np), _COMPUTE),
        grid=(Np // tn,),
        in_specs=[pl.BlockSpec((Mo, K), lambda n: (0, 0)),
                  pl.BlockSpec((K, tn), lambda n: (0, n))],
        out_specs=pl.BlockSpec((Mo, tn), lambda n: (0, n)),
        compiler_params=pltpu.CompilerParams(
            dimension_semantics=("parallel",),
            vmem_limit_bytes=_VMEM_LIMIT),
    )(wp, xp)
    return out[:, :N] if Np != N else out


@functools.partial(jax.jit,
                   static_argnames=("out_h", "out_w", "align_corners", "act"))
def bilinear_upsample(x, out_h, out_w, align_corners, act="none"):
    # TODO(synk): a fused NHWC 2-tap upsample kernel is not used because
    # align_corners=True gives non-constant tap weights; the layout transposes
    # around the two interp matmuls are left to XLA.
    B, H, W, C = x.shape
    Wh = _interp_matrix(out_h, H, align_corners)
    Ww = _interp_matrix(out_w, W, align_corners)

    # interpolate along H:  (out_h, H) @ (H, B*W*C)
    xt = jnp.transpose(x, (1, 0, 2, 3)).reshape(H, B * W * C)
    y = _interp_matmul(Wh, xt, act="none")
    y = y.reshape(out_h, B, W, C).transpose(1, 0, 2, 3)          # (B, Ho, W, C)

    # interpolate along W:  (out_w, W) @ (W, B*Ho*C)  (+ optional fused sigmoid)
    yt = jnp.transpose(y, (2, 0, 1, 3)).reshape(W, B * out_h * C)
    z = _interp_matmul(Ww, yt, act=act)
    z = z.reshape(out_w, B, out_h, C).transpose(1, 2, 0, 3)      # (B, Ho, Wo, C)
    return z


# ----------------------------------------------------------------------------
# Deterministic parameter generation (synthetic weights, eval-mode BN folded)
# ----------------------------------------------------------------------------
class ParamGen:
    def __init__(self, seed):
        self.key = jax.random.PRNGKey(seed)

    def _next(self):
        self.key, k = jax.random.split(self.key)
        return k

    def conv(self, kh, kw, cin, cout, bias=False):
        fan_in = kh * kw * cin
        w = jax.random.normal(self._next(), (kh, kw, cin, cout),
                              jnp.float32) / math.sqrt(fan_in)
        b = (0.01 * jax.random.normal(self._next(), (cout,), jnp.float32)
             if bias else None)
        return w, b

    def bn(self, c):
        gamma = 1.0 + 0.1 * jax.random.normal(self._next(), (c,), jnp.float32)
        beta = 0.1 * jax.random.normal(self._next(), (c,), jnp.float32)
        mean = 0.1 * jax.random.normal(self._next(), (c,), jnp.float32)
        var = 1.0 + 0.1 * jnp.abs(jax.random.normal(self._next(), (c,),
                                                    jnp.float32))
        scale = gamma / jnp.sqrt(var + 1e-5)
        bias = beta - mean * scale
        return scale, bias


def pack_conv(w, scale, bias):
    """Reshape to (K, Cout), pad Cout to a lane multiple, cast to bf16 once.

    K is kept exact (single-K kernels / row-path slicing need no padding);
    it is only rounded up to 128 when a K-grid will be used (K > _MAX_TK)."""
    kh, kw, cin, cout = w.shape
    K = kh * kw * cin
    Kp = K if K <= _MAX_TK else _round_up(K, 128)
    Np = _round_up(cout, 128)
    w2 = jnp.pad(w.reshape(K, cout), ((0, Kp - K), (0, Np - cout))).astype(_COMPUTE)
    s = jnp.pad(scale.astype(jnp.float32), (0, Np - cout),
                constant_values=1.0).reshape(1, Np)
    z = jnp.pad(bias.astype(jnp.float32), (0, Np - cout)).reshape(1, Np)
    return {"w": w2, "scale": s, "bias": z,
            "kh": kh, "kw": kw, "cin": cin, "cout": cout}


def make_bottleneck(pg, inplanes, planes, stride, downsample):
    p = {"stride": stride}
    w, _ = pg.conv(1, 1, inplanes, planes); s, b = pg.bn(planes)
    p["conv1"] = pack_conv(w, s, b)
    w, _ = pg.conv(3, 3, planes, planes); s, b = pg.bn(planes)
    p["conv2"] = pack_conv(w, s, b)
    w, _ = pg.conv(1, 1, planes, planes * 4); s, b = pg.bn(planes * 4)
    p["conv3"] = pack_conv(w, s, b)
    if downsample:
        w, _ = pg.conv(1, 1, inplanes, planes * 4); s, b = pg.bn(planes * 4)
        p["dconv"] = pack_conv(w, s, b)
    return p


def make_layer(pg, inplanes, planes, blocks, stride):
    params = [make_bottleneck(pg, inplanes, planes, stride,
                              stride != 1 or inplanes != planes * 4)]
    inplanes = planes * 4
    for _ in range(blocks - 1):
        params.append(make_bottleneck(pg, inplanes, planes, 1, False))
    return params, inplanes


def make_double_conv(pg, cin, cout, cmid):
    w1, _ = pg.conv(3, 3, cin, cmid); s1, b1 = pg.bn(cmid)
    w2, _ = pg.conv(3, 3, cmid, cout); s2, b2 = pg.bn(cout)
    return (pack_conv(w1, s1, b1), pack_conv(w2, s2, b2))


def build_params(n_channels, n_classes, seed=0):
    pg = ParamGen(seed)
    P = {}
    # inconv: Conv2d(n_channels,64,3,pad=1,bias=True) + BN + ReLU
    w, cb = pg.conv(3, 3, n_channels, 64, bias=True)
    s, b = pg.bn(64)
    P["inconv"] = pack_conv(w, s, b + cb * s)
    inplanes = 64
    P["layer1"], inplanes = make_layer(pg, inplanes, 64, 3, 1)
    P["layer2"], inplanes = make_layer(pg, inplanes, 128, 4, 2)
    P["layer3"], inplanes = make_layer(pg, inplanes, 256, 6, 2)
    P["layer4"], inplanes = make_layer(pg, inplanes, 512, 3, 2)
    # bridge: MaxPool2d(2) + Conv2d(2048,2048,3,pad=1,bias=False) + BN + ReLU
    w, _ = pg.conv(3, 3, 2048, 2048)
    s, b = pg.bn(2048)
    P["bridge"] = pack_conv(w, s, b)
    # Up blocks (bilinear): DoubleConv(in, out, mid=in//2)
    P["up1"] = make_double_conv(pg, 4096, 1024, 2048)
    P["up2"] = make_double_conv(pg, 2048, 512, 1024)
    P["up3"] = make_double_conv(pg, 1024, 256, 512)
    P["up4"] = make_double_conv(pg, 512, 64, 256)
    P["up5"] = make_double_conv(pg, 128, 32, 64)
    # OutConv(32, n_classes): 1x1 conv with bias
    w, cb = pg.conv(1, 1, 32, n_classes, bias=True)
    P["outc"] = pack_conv(w, jnp.ones((n_classes,), jnp.float32), cb)
    # outconv1..5: 3x3 conv C->1 with bias
    for i, cin in zip(range(1, 6), (1024, 512, 256, 64, 32)):
        w, cb = pg.conv(3, 3, cin, 1, bias=True)
        P[f"outconv{i}"] = pack_conv(w, jnp.ones((1,), jnp.float32), cb)
    return P


# ----------------------------------------------------------------------------
# forward pass
# ----------------------------------------------------------------------------
def bottleneck_forward(x, p):
    if "dconv" in p:
        identity = conv_bn_act(x, p["dconv"], stride=p["stride"], padding=0,
                               act="none")
    else:
        identity = x
    out = conv_bn_act(x, p["conv1"], stride=1, padding=0, act="relu")
    out = conv_bn_act(out, p["conv2"], stride=p["stride"], padding=1, act="relu")
    # residual add + ReLU fused into the 1x1 conv3 matmul epilogue
    out = conv_bn_act(out, p["conv3"], stride=1, padding=0, act="relu",
                      residual=identity)
    return out


def layer_forward(x, blocks):
    for p in blocks:
        x = bottleneck_forward(x, p)
    return x


def up_forward(x_small, x_skip, dc):
    xu = bilinear_upsample(x_small, out_h=x_skip.shape[1],
                           out_w=x_skip.shape[2], align_corners=True)
    # TODO(synk): the skip concat is not folded into the first conv's K loop
    # (two-source K-block accumulation); it is a single small channel concat.
    x = jnp.concatenate([x_skip, xu], axis=-1)
    x = conv_bn_act(x, dc[0], stride=1, padding=1, act="relu")
    x = conv_bn_act(x, dc[1], stride=1, padding=1, act="relu")
    return x


def unet_forward(P, x_nchw):
    x = jnp.transpose(x_nchw, (0, 2, 3, 1)).astype(_COMPUTE)      # NHWC, bf16
    H, W = x.shape[1], x.shape[2]

    x1 = conv_bn_act(x, P["inconv"], stride=1, padding=1, act="relu")
    x2 = layer_forward(maxpool2d(x1, ksize=3, stride=2, padding=1), P["layer1"])
    x3 = layer_forward(x2, P["layer2"])
    x4 = layer_forward(x3, P["layer3"])
    x5 = layer_forward(x4, P["layer4"])
    x6 = conv_bn_act(maxpool2d(x5, ksize=2, stride=2, padding=0),
                     P["bridge"], stride=1, padding=1, act="relu")

    out1 = up_forward(x6, x5, P["up1"])
    out2 = up_forward(out1, x4, P["up2"])
    out3 = up_forward(out2, x3, P["up3"])
    out4 = up_forward(out3, x2, P["up4"])
    out5 = up_forward(out4, x1, P["up5"])

    logits_sig = conv_bn_act(out5, P["outc"], stride=1, padding=0, act="sigmoid")

    def side(out, name, scale):
        if scale == 1:
            # sigmoid fused directly into the side conv's epilogue
            return conv_bn_act(out, P[name], stride=1, padding=1, act="sigmoid")
        y = conv_bn_act(out, P[name], stride=1, padding=1, act="none")
        # sigmoid fused into the final interpolation matmul
        return bilinear_upsample(y, out_h=H, out_w=W, align_corners=False,
                                 act="sigmoid")

    o1 = side(out1, "outconv1", 16)
    o2 = side(out2, "outconv2", 8)
    o3 = side(out3, "outconv3", 4)
    o4 = side(out4, "outconv4", 2)
    o5 = side(out5, "outconv5", 1)

    to_nchw = lambda t: jnp.transpose(t, (0, 3, 1, 2)).astype(jnp.float32)
    return tuple(to_nchw(t) for t in (logits_sig, o5, o4, o3, o2, o1))


# ----------------------------------------------------------------------------
# main
# ----------------------------------------------------------------------------
if __name__ == "__main__":
    n_channels, n_classes = 3, 2
    B, H, W = 1, 64, 64                      # small but divisible by 32

    params = build_params(n_channels, n_classes, seed=0)
    x = jax.random.normal(jax.random.PRNGKey(0), (B, n_channels, H, W),
                          jnp.float32)

    outs = unet_forward(params, x)
    outs = jax.block_until_ready(outs)

    expected = [(B, n_classes, H, W)] + [(B, 1, H, W)] * 5
    assert [tuple(o.shape) for o in outs] == expected, \
        [tuple(o.shape) for o in outs]
    assert all(bool(jnp.all(jnp.isfinite(o))) for o in outs)
    print("KERNEL_OK")
</pallas_src>

<mosaic_0001>
module attributes {stable_mosaic.version = 11 : i64} {
  func.func @_mm1_kernel(%arg0: i32, %arg1: i32, %arg2: memref<512x27xbf16, #tpu.memory_space<vmem>>, %arg3: memref<27x128xbf16, #tpu.memory_space<vmem>>, %arg4: memref<1x128xf32, #tpu.memory_space<vmem>>, %arg5: memref<1x128xf32, #tpu.memory_space<vmem>>, %arg6: memref<512x128xbf16, #tpu.memory_space<vmem>>) attributes {dimension_semantics = [#tpu.dimension_semantics<parallel>, #tpu.dimension_semantics<parallel>], iteration_bounds = array<i64: 8, 1>, scalar_prefetch = 0 : i64, scratch_operands = 0 : i64, tpu.core_type = #tpu.core_type<tc>, window_params = [{transform_indices = @transform_0, window_bounds = array<i64: 512, 27>}, {transform_indices = @transform_1, window_bounds = array<i64: 27, 128>}, {transform_indices = @transform_2, window_bounds = array<i64: 1, 128>}, {transform_indices = @transform_3, window_bounds = array<i64: 1, 128>}, {transform_indices = @transform_4, window_bounds = array<i64: 512, 128>}]} {
    %c0 = arith.constant 0 : index
    %c0_0 = arith.constant 0 : index
    %0 = vector.load %arg2[%c0, %c0_0] : memref<512x27xbf16, #tpu.memory_space<vmem>>, vector<512x27xbf16>
    %c0_1 = arith.constant 0 : index
    %c0_2 = arith.constant 0 : index
    %1 = vector.load %arg3[%c0_1, %c0_2] : memref<27x128xbf16, #tpu.memory_space<vmem>>, vector<27x128xbf16>
    %cst = arith.constant dense<0.000000e+00> : vector<512x128xf32>
    %2 = tpu.matmul %0, %1, %cst {dimension_numbers = #tpu.dot_dimension_numbers<[1], [0], [0], [1], [0, 0, 1, 1], [], []>} : vector<512x27xbf16>, vector<27x128xbf16>, vector<512x128xf32> -> vector<512x128xf32>
    %c0_3 = arith.constant 0 : index
    %c0_4 = arith.constant 0 : index
    %3 = vector.load %arg4[%c0_3, %c0_4] : memref<1x128xf32, #tpu.memory_space<vmem>>, vector<1x128xf32>
    %4 = vector.broadcast %3 : vector<1x128xf32> to vector<512x128xf32>
    %5 = arith.mulf %2, %4 : vector<512x128xf32>
    %c0_5 = arith.constant 0 : index
    %c0_6 = arith.constant 0 : index
    %6 = vector.load %arg5[%c0_5, %c0_6] : memref<1x128xf32, #tpu.memory_space<vmem>>, vector<1x128xf32>
    %7 = vector.broadcast %6 : vector<1x128xf32> to vector<512x128xf32>
    %8 = arith.addf %5, %7 : vector<512x128xf32>
    %cst_7 = arith.constant 0.000000e+00 : f32
    %9 = vector.broadcast %cst_7 : f32 to vector<512x128xf32>
    %10 = arith.maximumf %8, %9 : vector<512x128xf32>
    %11 = arith.truncf %10 : vector<512x128xf32> to vector<512x128xbf16>
    %c0_8 = arith.constant 0 : index
    %c0_9 = arith.constant 0 : index
    %12 = vector.load %arg6[%c0_8, %c0_9] : memref<512x128xbf16, #tpu.memory_space<vmem>>, vector<512x128xbf16>
    tpu.vector_store %arg6[%c0_8, %c0_9], %11 {strides = array<i32>} : memref<512x128xbf16, #tpu.memory_space<vmem>>, vector<512x128xbf16>,
    return
  }
  func.func @transform_0(%arg0: i32, %arg1: i32) -> (i32, i32) {
    %c0_i32 = arith.constant 0 : i32
    %c0_i32_0 = arith.constant 0 : i32
    return %arg0, %c0_i32 : i32, i32
  }
  func.func @transform_1(%arg0: i32, %arg1: i32) -> (i32, i32) {
    %c0_i32 = arith.constant 0 : i32
    %c0_i32_0 = arith.constant 0 : i32
    return %c0_i32, %arg1 : i32, i32
  }
  func.func @transform_2(%arg0: i32, %arg1: i32) -> (i32, i32) {
    %c0_i32 = arith.constant 0 : i32
    %c0_i32_0 = arith.constant 0 : i32
    return %c0_i32, %arg1 : i32, i32
  }
  func.func @transform_3(%arg0: i32, %arg1: i32) -> (i32, i32) {
    %c0_i32 = arith.constant 0 : i32
    %c0_i32_0 = arith.constant 0 : i32
    return %c0_i32, %arg1 : i32, i32
  }
  func.func @transform_4(%arg0: i32, %arg1: i32) -> (i32, i32) {
    %c0_i32 = arith.constant 0 : i32
    return %arg0, %arg1 : i32, i32
  }
}

</mosaic_0001>

<llo_original>
// kernel: _conv_fallback.1
$region0: #{_conv_fallback.1}
  #allocation0 [shape = 'u32[]', space=smem, size = 0x4, offset = 0x4, fixed_abs, tag = 'smem constant byte address 0x4 - core index']
  #allocation1 [shape = 'u32[72,128]{1,0:T(1,128)}', space=vmem, size = 0x9000, scoped, tag = 'internal scratch']
  %s0 = inlined_call_operand.vmem [shape: bf16[4096,27], index: 0, kind: input, shape index: {}]
  %s1 = inlined_call_operand.vmem [shape: bf16[27,128], index: 1, kind: input, shape index: {}]
  %s2 = inlined_call_operand.vmem [shape: f32[1,128], index: 2, kind: input, shape index: {}]
  %s3 = inlined_call_operand.vmem [shape: f32[1,128], index: 3, kind: input, shape index: {}]
  %s4 = inlined_call_operand.hbm [shape: bf16[4096,128], index: 4, kind: output, shape index: {}]
  %s5 = sld [smem:[#allocation0]]
  $region49: #{_conv_fallback.1} parent=0
    _
  %s7 = ssub.s32 1, %s5
  %s8 = scalar_select 0, %s7, %s5
  $region1: #{_conv_fallback.1} parent=0
    #allocation2 [shape = 'u8[262144]{0}', space=vmem, size = 0x40000, scoped, tag = 'output window, operand 0']
    #allocation3 [shape = 's32[2]{0}', space=sflag, size = 0x8, scoped, tag = 'scoped memory for _conv_fallback.1']
    %9 = vsyncpa [#allocation3], 0
    %s10 = scalar_lea.sflag [#allocation3], 1
    %11 = vsyncpa %s10, 0
    loop: start=0, step=1, limit=10
    $region2: #{_conv_fallback.1} parent=1 // loop_pre_header
      _
    $region3: #{_conv_fallback.1} parent=1 // loop_header
      %s13 = sphi 0, %s17
      %p14 = scmp.ge.s32.totalorder %s13, 10
      %s20 = sphi 0, %s32
      %s21 = sphi 0, %s28
      %s22 = sphi 0, %s20
      %s23 = sphi 0, %s21
      %s24 = sphi 0, %s22
      %s25 = sphi 0, %s23
      %s35 = sphi 0, %s37
      %s38 = sphi 0, %s35
      %s39 = sphi 0, %s38
      %s55 = sphi 0, %s39
      %s61 = sphi 0, %s63
      %s64 = sphi 0, %s61
      %s65 = sphi 0, %s64
      %s81 = sphi 0, %s65
      %s87 = sphi 0, %s89
      %s90 = sphi 0, %s87
      %s91 = sphi 0, %s90
      %s107 = sphi 0, %s91
      %s113 = sphi 0, %s115
      %s116 = sphi 0, %s113
      %s117 = sphi 0, %s116
      %s133 = sphi 0, %s117
      %s141 = sphi 0, %s143
      %s144 = sphi 0, %s141
      %s145 = sphi 0, %s144
      %s161 = sphi 0, %s145
    $region4: #{_conv_fallback.1} parent=1 // loop_header_branch
      %16 = sbr.rel (%p14) target = $region8
    $region5: #{_conv_fallback.1} parent=1 // loop_body
      %s18 = ssub.s32 %s13, 1
      %s19 = ssub.s32 %s13, 2
      %s26 = sadd.s32 1, %s21
      %p27 = scmp.ge.s32.totalorder %s26, 1
      %s28 = scalar_select %p27, 0, %s26
      %s29 = sadd.s32 1, %s20
      %s30 = scalar_select %p27, %s29, %s20
      %p31 = scmp.ge.s32.totalorder %s30, 8
      %s32 = scalar_select %p31, 0, %s30
      %s33 = ssub.s32 %s20, %s32
      %p34 = scmp.eq.s32.totalorder %s33, 0
      %s36 = sadd.s32 %s35, 1
      %s37 = scalar_select %p34, %s35, %s36
      %p40 = pneg %p34
      %p41 = scmp.eq.s32.totalorder %s13, 7
      %p42 = por %p40, %p41
      %p43 = scmp.ne.s32.totalorder %s35, %s38
      %p44 = scmp.eq.s32.totalorder %s13, 0
      %p45 = por %p43, %p44
      %p46 = scmp.ne.s32.totalorder %s35, %s38
      %p47 = scmp.eq.s32.totalorder %s18, 7
      %p48 = por %p46, %p47
      %p49 = scmp.ne.s32.totalorder %s38, %s39
      %p50 = scmp.eq.s32.totalorder %s18, 0
      %p51 = por %p49, %p50
      %p52 = scmp.ne.s32.totalorder %s38, %s39
      %p53 = scmp.eq.s32.totalorder %s19, 7
      %p54 = por %p52, %p53
      %p56 = scmp.ne.s32.totalorder %s39, %s55
      %p57 = scmp.eq.s32.totalorder %s19, 0
      %p58 = por %p56, %p57
      %s59 = ssub.s32 %s21, %s28
      %p60 = scmp.eq.s32.totalorder %s59, 0
      %s62 = sadd.s32 %s61, 1
      %s63 = scalar_select %p60, %s61, %s62
      %p66 = pneg %p60
      %p67 = scmp.eq.s32.totalorder %s13, 7
      %p68 = por %p66, %p67
      %p69 = scmp.ne.s32.totalorder %s61, %s64
      %p70 = scmp.eq.s32.totalorder %s13, 0
      %p71 = por %p69, %p70
      %p72 = scmp.ne.s32.totalorder %s61, %s64
      %p73 = scmp.eq.s32.totalorder %s18, 7
      %p74 = por %p72, %p73
      %p75 = scmp.ne.s32.totalorder %s64, %s65
      %p76 = scmp.eq.s32.totalorder %s18, 0
      %p77 = por %p75, %p76
      %p78 = scmp.ne.s32.totalorder %s64, %s65
      %p79 = scmp.eq.s32.totalorder %s19, 7
      %p80 = por %p78, %p79
      %p82 = scmp.ne.s32.totalorder %s65, %s81
      %p83 = scmp.eq.s32.totalorder %s19, 0
      %p84 = por %p82, %p83
      %s85 = ssub.s32 %s21, %s28
      %p86 = scmp.eq.s32.totalorder %s85, 0
      %s88 = sadd.s32 %s87, 1
      %s89 = scalar_select %p86, %s87, %s88
      %p92 = pneg %p86
      %p93 = scmp.eq.s32.totalorder %s13, 7
      %p94 = por %p92, %p93
      %p95 = scmp.ne.s32.totalorder %s87, %s90
      %p96 = scmp.eq.s32.totalorder %s13, 0
      %p97 = por %p95, %p96
      %p98 = scmp.ne.s32.totalorder %s87, %s90
      %p99 = scmp.eq.s32.totalorder %s18, 7
      %p100 = por %p98, %p99
      %p101 = scmp.ne.s32.totalorder %s90, %s91
      %p102 = scmp.eq.s32.totalorder %s18, 0
      %p103 = por %p101, %p102
      %p104 = scmp.ne.s32.totalorder %s90, %s91
      %p105 = scmp.eq.s32.totalorder %s19, 7
      %p106 = por %p104, %p105
      %p108 = scmp.ne.s32.totalorder %s91, %s107
      %p109 = scmp.eq.s32.totalorder %s19, 0
      %p110 = por %p108, %p109
      %s111 = ssub.s32 %s21, %s28
      %p112 = scmp.eq.s32.totalorder %s111, 0
      %s114 = sadd.s32 %s113, 1
      %s115 = scalar_select %p112, %s113, %s114
      %p118 = pneg %p112
      %p119 = scmp.eq.s32.totalorder %s13, 7
      %p120 = por %p118, %p119
      %p121 = scmp.ne.s32.totalorder %s113, %s116
      %p122 = scmp.eq.s32.totalorder %s13, 0
      %p123 = por %p121, %p122
      %p124 = scmp.ne.s32.totalorder %s113, %s116
      %p125 = scmp.eq.s32.totalorder %s18, 7
      %p126 = por %p124, %p125
      %p127 = scmp.ne.s32.totalorder %s116, %s117
      %p128 = scmp.eq.s32.totalorder %s18, 0
      %p129 = por %p127, %p128
      %p130 = scmp.ne.s32.totalorder %s116, %s117
      %p131 = scmp.eq.s32.totalorder %s19, 7
      %p132 = por %p130, %p131
      %p134 = scmp.ne.s32.totalorder %s117, %s133
      %p135 = scmp.eq.s32.totalorder %s19, 0
      %p136 = por %p134, %p135
      %s137 = ssub.s32 %s20, %s32
      %s138 = ssub.s32 %s21, %s28
      %s139 = sor.u32 %s137, %s138
      %p140 = scmp.eq.s32.totalorder %s139, 0
      %s142 = sadd.s32 %s141, 1
      %s143 = scalar_select %p140, %s141, %s142
      %p146 = pneg %p140
      %p147 = scmp.eq.s32.totalorder %s13, 7
      %p148 = por %p146, %p147
      %p149 = scmp.ne.s32.totalorder %s141, %s144
      %p150 = scmp.eq.s32.totalorder %s13, 0
      %p151 = por %p149, %p150
      %p152 = scmp.ne.s32.totalorder %s141, %s144
      %p153 = scmp.eq.s32.totalorder %s18, 7
      %p154 = por %p152, %p153
      %p155 = scmp.ne.s32.totalorder %s144, %s145
      %p156 = scmp.eq.s32.totalorder %s18, 0
      %p157 = por %p155, %p156
      %p158 = scmp.ne.s32.totalorder %s144, %s145
      %p159 = scmp.eq.s32.totalorder %s19, 7
      %p160 = por %p158, %p159
      %p162 = scmp.ne.s32.totalorder %s145, %s161
      %p163 = scmp.eq.s32.totalorder %s19, 0
      %p164 = por %p162, %p163
      %p165 = scmp.le.s32.totalorder 1, %s13
      %p166 = scmp.lt.s32.totalorder %s13, 9
      %p167 = pnand %p165, %p166
      %p168 = pneg %p167
      // Predicated region
      $region9: #{_conv_fallback.1} parent=5 // pred_check
        _
      $region10: #{_conv_fallback.1} parent=5 // pred_check_branch
        %170 = sbr.rel (%p167) target = $region12
      $region11: #{_conv_fallback.1} parent=5 // pred_region
        %s171 = ssub.s32 %s13, 1
        // Predicated region
        $region13: #{_conv_fallback.1} parent=11 // pred_check
          %p172 = pneg %p77
        $region14: #{_conv_fallback.1} parent=11 // pred_check_branch
          %174 = sbr.rel (%p172) target = $region16
        $region15: #{_conv_fallback.1} parent=11 // pred_region
          %p175 = scmp.lt.s32.totalorder %s23, 0
          %s176 = scalar_select %p175, %s23, 0
          %s177 = smul.addr %s176, 4
          %s178 = scalar_lea.vmem %s1, %s177
        $region16: #{_conv_fallback.1} parent=11 // pred_fallthru
          _
        // Predicated region
        $region17: #{_conv_fallback.1} parent=11 // pred_check
          %p179 = pneg %p103
        $region18: #{_conv_fallback.1} parent=11 // pred_check_branch
          %181 = sbr.rel (%p179) target = $region20
        $region19: #{_conv_fallback.1} parent=11 // pred_region
          %p182 = scmp.lt.s32.totalorder %s23, 0
          %s183 = scalar_select %p182, %s23, 0
          %s184 = scalar_lea.vmem %s2, %s183
        $region20: #{_conv_fallback.1} parent=11 // pred_fallthru
          _
        // Predicated region
        $region21: #{_conv_fallback.1} parent=11 // pred_check
          %p185 = pneg %p129
        $region22: #{_conv_fallback.1} parent=11 // pred_check_branch
          %187 = sbr.rel (%p185) target = $region24
        $region23: #{_conv_fallback.1} parent=11 // pred_region
          %p188 = scmp.lt.s32.totalorder %s23, 0
          %s189 = scalar_select %p188, %s23, 0
          %s190 = scalar_lea.vmem %s3, %s189
        $region24: #{_conv_fallback.1} parent=11 // pred_fallthru
          _
      $region12: #{_conv_fallback.1} parent=5 // pred_fallthru
        _
      %p191 = scmp.lt.s32.totalorder %s13, 8
      // Predicated region
      $region25: #{_conv_fallback.1} parent=5 // pred_check
        %p192 = pneg %p191
      $region26: #{_conv_fallback.1} parent=5 // pred_check_branch
        %194 = sbr.rel (%p192) target = $region28
      $region27: #{_conv_fallback.1} parent=5 // pred_region
        // Predicated region
        $region29: #{_conv_fallback.1} parent=27 // pred_check
          %p195 = pneg %p45
        $region30: #{_conv_fallback.1} parent=27 // pred_check_branch
          %197 = sbr.rel (%p195) target = $region32
        $region31: #{_conv_fallback.1} parent=27 // pred_region
          %s198 = smul.u32 64, %s20
          %p199 = scmp.lt.s32.totalorder %s198, 511
          %s200 = scalar_select %p199, %s198, 511
          %s201 = smul.addr %s200, 4
          %s202 = scalar_lea.vmem %s0, %s201
          %s203 = smul.u32 64, %s20
        $region32: #{_conv_fallback.1} parent=27 // pred_fallthru
          _
      $region28: #{_conv_fallback.1} parent=5 // pred_fallthru
        _
      %p204 = scmp.le.s32.totalorder 1, %s13
      %p205 = scmp.lt.s32.totalorder %s13, 9
      %p206 = pnand %p204, %p205
      %p207 = pneg %p206
      // Predicated region
      $region33: #{_conv_fallback.1} parent=5 // pred_check
        _
      $region34: #{_conv_fallback.1} parent=5 // pred_check_branch
        %209 = sbr.rel (%p206) target = $region36
      $region35: #{_conv_fallback.1} parent=5 // pred_region
        %s210 = ssub.s32 %s13, 1
        %s211 = smul.u32 64, %s22
        %p212 = scmp.lt.s32.totalorder %s211, 511
        %s213 = scalar_select %p212, %s211, 511
        %s214 = smul.addr %s213, 4
        %s215 = scalar_lea.vmem %s0, %s214
        %p216 = pneg %p51
        %p217 = pneg %p48
        %p218 = scmp.lt.s32.totalorder %s23, 0
        %s219 = scalar_select %p218, %s23, 0
        %s220 = smul.addr %s219, 4
        %s221 = scalar_lea.vmem %s1, %s220
        %p222 = pneg %p77
        %p223 = pneg %p74
        %p224 = scmp.lt.s32.totalorder %s23, 0
        %s225 = scalar_select %p224, %s23, 0
        %s226 = scalar_lea.vmem %s2, %s225
        %p227 = pneg %p103
        %p228 = pneg %p100
        %p229 = scmp.lt.s32.totalorder %s23, 0
        %s230 = scalar_select %p229, %s23, 0
        %s231 = scalar_lea.vmem %s3, %s230
        %p232 = pneg %p129
        %p233 = pneg %p126
        %p234 = pneg %p157
        %p235 = pneg %p154
        %s236 = sand.u32 %s144, 1
        %s237 = scalar_lea.sflag [#allocation3], %s236
        %s238 = sand.u32 %s144, 1
        %s239 = smul.addr %s238, 256
        %s240 = scalar_lea.vmem [#allocation2], %s239
        %s241 = smul.u32 64, %s22
        %p242 = scmp.lt.s32.totalorder %s241, 511
        %s243 = scalar_select %p242, %s241, 511
        %s244 = smul.addr %s243, 4
        %s245 = scalar_lea.vmem %s0, %s244
        %s246 = smul.u32 64, %s22
        %p247 = scmp.lt.s32.totalorder %s23, 0
        %s248 = scalar_select %p247, %s23, 0
        %s249 = smul.addr %s248, 4
        %s250 = scalar_lea.vmem %s1, %s249
        %p251 = scmp.lt.s32.totalorder %s23, 0
        %s252 = scalar_select %p251, %s23, 0
        %s253 = scalar_lea.vmem %s2, %s252
        %p254 = scmp.lt.s32.totalorder %s23, 0
        %s255 = scalar_select %p254, %s23, 0
        %s256 = scalar_lea.vmem %s3, %s255
        %s257 = smul.u32 64, %s22
        %v259 = vld [vmem:[%s245] sm:$0xf]
        %v260 = vld [vmem:[%s245 + $0x4] sm:$0xf]
        %v261 = vld [vmem:[%s245 + $0x8] sm:$0xf]
        %v262 = vld [vmem:[%s245 + $0xc] sm:$0xf]
        %v263 = vld [vmem:[%s245 + $0x10] sm:$0xf]
        %v264 = vld [vmem:[%s245 + $0x14] sm:$0xf]
        %v265 = vld [vmem:[%s245 + $0x18] sm:$0xf]
        %v266 = vld [vmem:[%s245 + $0x1c] sm:$0xf]
        %v267 = vld [vmem:[%s245 + $0x20] sm:$0xf]
        %v268 = vld [vmem:[%s245 + $0x24] sm:$0xf]
        %v269 = vld [vmem:[%s245 + $0x28] sm:$0xf]
        %v270 = vld [vmem:[%s245 + $0x2c] sm:$0xf]
        %v271 = vld [vmem:[%s245 + $0x30] sm:$0xf]
        %v272 = vld [vmem:[%s245 + $0x34] sm:$0xf]
        %v273 = vld [vmem:[%s245 + $0x38] sm:$0xf]
        %v274 = vld [vmem:[%s245 + $0x3c] sm:$0xf]
        %v275 = vld [vmem:[%s245 + $0x40] sm:$0xf]
        %v276 = vld [vmem:[%s245 + $0x44] sm:$0xf]
        %v277 = vld [vmem:[%s245 + $0x48] sm:$0xf]
        %v278 = vld [vmem:[%s245 + $0x4c] sm:$0xf]
        %v279 = vld [vmem:[%s245 + $0x50] sm:$0xf]
        %v280 = vld [vmem:[%s245 + $0x54] sm:$0xf]
        %v281 = vld [vmem:[%s245 + $0x58] sm:$0xf]
        %v282 = vld [vmem:[%s245 + $0x5c] sm:$0xf]
        %v283 = vld [vmem:[%s245 + $0x60] sm:$0xf]
        %v284 = vld [vmem:[%s245 + $0x64] sm:$0xf]
        %v285 = vld [vmem:[%s245 + $0x68] sm:$0xf]
        %v286 = vld [vmem:[%s245 + $0x6c] sm:$0xf]
        %v287 = vld [vmem:[%s245 + $0x70] sm:$0xf]
        %v288 = vld [vmem:[%s245 + $0x74] sm:$0xf]
        %v289 = vld [vmem:[%s245 + $0x78] sm:$0xf]
        %v290 = vld [vmem:[%s245 + $0x7c] sm:$0xf]
        %v291 = vld [vmem:[%s245 + $0x80] sm:$0xf]
        %v292 = vld [vmem:[%s245 + $0x84] sm:$0xf]
        %v293 = vld [vmem:[%s245 + $0x88] sm:$0xf]
        %v294 = vld [vmem:[%s245 + $0x8c] sm:$0xf]
        %v295 = vld [vmem:[%s245 + $0x90] sm:$0xf]
        %v296 = vld [vmem:[%s245 + $0x94] sm:$0xf]
        %v297 = vld [vmem:[%s245 + $0x98] sm:$0xf]
        %v298 = vld [vmem:[%s245 + $0x9c] sm:$0xf]
        %v299 = vld [vmem:[%s245 + $0xa0] sm:$0xf]
        %v300 = vld [vmem:[%s245 + $0xa4] sm:$0xf]
        %v301 = vld [vmem:[%s245 + $0xa8] sm:$0xf]
        %v302 = vld [vmem:[%s245 + $0xac] sm:$0xf]
        %v303 = vld [vmem:[%s245 + $0xb0] sm:$0xf]
        %v304 = vld [vmem:[%s245 + $0xb4] sm:$0xf]
        %v305 = vld [vmem:[%s245 + $0xb8] sm:$0xf]
        %v306 = vld [vmem:[%s245 + $0xbc] sm:$0xf]
        %v307 = vld [vmem:[%s245 + $0xc0] sm:$0xf]
        %v308 = vld [vmem:[%s245 + $0xc4] sm:$0xf]
        %v309 = vld [vmem:[%s245 + $0xc8] sm:$0xf]
        %v310 = vld [vmem:[%s245 + $0xcc] sm:$0xf]
        %v311 = vld [vmem:[%s245 + $0xd0] sm:$0xf]
        %v312 = vld [vmem:[%s245 + $0xd4] sm:$0xf]
        %v313 = vld [vmem:[%s245 + $0xd8] sm:$0xf]
        %v314 = vld [vmem:[%s245 + $0xdc] sm:$0xf]
        %v315 = vld [vmem:[%s245 + $0xe0] sm:$0xf]
        %v316 = vld [vmem:[%s245 + $0xe4] sm:$0xf]
        %v317 = vld [vmem:[%s245 + $0xe8] sm:$0xf]
        %v318 = vld [vmem:[%s245 + $0xec] sm:$0xf]
        %v319 = vld [vmem:[%s245 + $0xf0] sm:$0xf]
        %v320 = vld [vmem:[%s245 + $0xf4] sm:$0xf]
        %v321 = vld [vmem:[%s245 + $0xf8] sm:$0xf]
        %v322 = vld [vmem:[%s245 + $0xfc] sm:$0xf]
        %v323 = vld [vmem:[%s250] sm:$0xf]
        %v324 = vld [vmem:[%s250 + $0x4] sm:$0xf]
        %v325 = vld [vmem:[%s250 + $0x8] sm:$0xf]
        %v326 = vld [vmem:[%s250 + $0xc] sm:$0x3]
        %v391 = vunpack.c.l.b16 %v259
        %v392 = vunpack.c.l.b16 %v260
        %v393 = vunpack.c.l.b16 %v261
        %v394 = vunpack.c.l.b16 %v262
        %v395 = vunpack.c.l.b16 %v263
        %v396 = vunpack.c.l.b16 %v264
        %v397 = vunpack.c.l.b16 %v265
        %v398 = vunpack.c.l.b16 %v266
        %v399 = vunpack.c.l.b16 %v267
        %v400 = vunpack.c.l.b16 %v268
        %v401 = vunpack.c.l.b16 %v269
        %v402 = vunpack.c.l.b16 %v270
        %v403 = vunpack.c.l.b16 %v271
        %v404 = vunpack.c.l.b16 %v272
        %v405 = vunpack.c.l.b16 %v273
        %v406 = vunpack.c.l.b16 %v274
        %v407 = vunpack.c.l.b16 %v275
        %v408 = vunpack.c.l.b16 %v276
        %v409 = vunpack.c.l.b16 %v277
        %v410 = vunpack.c.l.b16 %v278
        %v411 = vunpack.c.l.b16 %v279
        %v412 = vunpack.c.l.b16 %v280
        %v413 = vunpack.c.l.b16 %v281
        %v414 = vunpack.c.l.b16 %v282
        %v415 = vunpack.c.l.b16 %v283
        %v416 = vunpack.c.l.b16 %v284
        %v417 = vunpack.c.l.b16 %v285
        %v418 = vunpack.c.l.b16 %v286
        %v419 = vunpack.c.l.b16 %v287
        %v420 = vunpack.c.l.b16 %v288
        %v421 = vunpack.c.l.b16 %v289
        %v422 = vunpack.c.l.b16 %v290
        %v423 = vunpack.c.l.b16 %v291
        %v424 = vunpack.c.l.b16 %v292
        %v425 = vunpack.c.l.b16 %v293
        %v426 = vunpack.c.l.b16 %v294
        %v427 = vunpack.c.l.b16 %v295
        %v428 = vunpack.c.l.b16 %v296
        %v429 = vunpack.c.l.b16 %v297
        %v430 = vunpack.c.l.b16 %v298
        %v431 = vunpack.c.l.b16 %v299
        %v432 = vunpack.c.l.b16 %v300
        %v433 = vunpack.c.l.b16 %v301
        %v434 = vunpack.c.l.b16 %v302
        %v435 = vunpack.c.l.b16 %v303
        %v436 = vunpack.c.l.b16 %v304
        %v437 = vunpack.c.l.b16 %v305
        %v438 = vunpack.c.l.b16 %v306
        %v439 = vunpack.c.l.b16 %v307
        %v440 = vunpack.c.l.b16 %v308
        %v441 = vunpack.c.l.b16 %v309
        %v442 = vunpack.c.l.b16 %v310
        %v443 = vunpack.c.l.b16 %v311
        %v444 = vunpack.c.l.b16 %v312
        %v445 = vunpack.c.l.b16 %v313
        %v446 = vunpack.c.l.b16 %v314
        %v447 = vunpack.c.l.b16 %v315
        %v448 = vunpack.c.l.b16 %v316
        %v449 = vunpack.c.l.b16 %v317
        %v450 = vunpack.c.l.b16 %v318
        %v451 = vunpack.c.l.b16 %v319
        %v452 = vunpack.c.l.b16 %v320
        %v453 = vunpack.c.l.b16 %v321
        %v454 = vunpack.c.l.b16 %v322
        %v455 = vpack.c.b16 %v392, %v391
        %v456 = vpack.c.b16 %v394, %v393
        %v457 = vpack.c.b16 %v396, %v395
        %v458 = vpack.c.b16 %v398, %v397
        %v459 = vpack.c.b16 %v400, %v399
        %v460 = vpack.c.b16 %v402, %v401
        %v461 = vpack.c.b16 %v404, %v403
        %v462 = vpack.c.b16 %v406, %v405
        %v463 = vpack.c.b16 %v408, %v407
        %v464 = vpack.c.b16 %v410, %v409
        %v465 = vpack.c.b16 %v412, %v411
        %v466 = vpack.c.b16 %v414, %v413
        %v467 = vpack.c.b16 %v416, %v415
        %v468 = vpack.c.b16 %v418, %v417
        %v469 = vpack.c.b16 %v420, %v419
        %v470 = vpack.c.b16 %v422, %v421
        %v471 = vpack.c.b16 %v424, %v423
        %v472 = vpack.c.b16 %v426, %v425
        %v473 = vpack.c.b16 %v428, %v427
        %v474 = vpack.c.b16 %v430, %v429
        %v475 = vpack.c.b16 %v432, %v431
        %v476 = vpack.c.b16 %v434, %v433
        %v477 = vpack.c.b16 %v436, %v435
        %v478 = vpack.c.b16 %v438, %v437
        %v479 = vpack.c.b16 %v440, %v439
        %v480 = vpack.c.b16 %v442, %v441
        %v481 = vpack.c.b16 %v444, %v443
        %v482 = vpack.c.b16 %v446, %v445
        %v483 = vpack.c.b16 %v448, %v447
        %v484 = vpack.c.b16 %v450, %v449
        %v485 = vpack.c.b16 %v452, %v451
        %v486 = vpack.c.b16 %v454, %v453
        %v491 = vunpack.c.l.b16 %v323
        %v492 = vunpack.c.l.b16 %v324
        %v493 = vunpack.c.l.b16 %v325
        %v494 = vunpack.c.l.b16 %v326
        %v495 = vpack.c.b16 %v492, %v491
        %v496 = vpack.c.b16 %v494, %v493
        %vm498 = vcmask 220160
        %v500 = vsel %vm498, %v455, 0
        %v503 = vsel %vm498, %v456, 0
        %v506 = vsel %vm498, %v457, 0
        %v509 = vsel %vm498, %v458, 0
        %v512 = vsel %vm498, %v459, 0
        %v515 = vsel %vm498, %v460, 0
        %v518 = vsel %vm498, %v461, 0
        %v521 = vsel %vm498, %v462, 0
        %v524 = vsel %vm498, %v463, 0
        %v527 = vsel %vm498, %v464, 0
        %v530 = vsel %vm498, %v465, 0
        %v533 = vsel %vm498, %v466, 0
        %v536 = vsel %vm498, %v467, 0
        %v539 = vsel %vm498, %v468, 0
        %v542 = vsel %vm498, %v469, 0
        %v545 = vsel %vm498, %v470, 0
        %v548 = vsel %vm498, %v471, 0
        %v551 = vsel %vm498, %v472, 0
        %v554 = vsel %vm498, %v473, 0
        %v557 = vsel %vm498, %v474, 0
        %v560 = vsel %vm498, %v475, 0
        %v563 = vsel %vm498, %v476, 0
        %v566 = vsel %vm498, %v477, 0
        %v569 = vsel %vm498, %v478, 0
        %v572 = vsel %vm498, %v479, 0
        %v575 = vsel %vm498, %v480, 0
        %v578 = vsel %vm498, %v481, 0
        %v581 = vsel %vm498, %v482, 0
        %v584 = vsel %vm498, %v483, 0
        %v587 = vsel %vm498, %v484, 0
        %v590 = vsel %vm498, %v485, 0
        %v593 = vsel %vm498, %v486, 0
        %vm595 = vcmask 1044480
        %vm596 = vcmask 1045504
        %v597 = vsel %vm595, 4294967295, 65535
        %v598 = vsel %vm596, %v597, 0
        %v600 = vand.u32 %v496, %v598
        %602 = vmatpush.bf16.msra.mxu0 0
        %603 = vmatpush.bf16.msra.mxu0 0
        %604 = vmatpush.bf16.msra.mxu0 0
        %605 = vmatpush.bf16.msra.mxu0 0
        %606 = vmatpush.bf16.msra.mxu0 0
        %607 = vmatpush.bf16.msra.mxu0 0
        %608 = vmatpush.bf16.msra.mxu0 %v600
        %609 = vmatpush.bf16.msra.mxu0 %v495
        %610 = vmatmul.bf16.gmra.mxu0 %v500
        %v611 = vpop.f32.mrf.mxu0
        %v612 = vadd.f32 0.0, %v611
        %v613 = vpop.f32.mrf.mxu0
        %v614 = vadd.f32 0.0, %v613
        %615 = vmatmul.bf16.gmra.mxu0 %v503
        %v616 = vpop.f32.mrf.mxu0
        %v617 = vadd.f32 0.0, %v616
        %v618 = vpop.f32.mrf.mxu0
        %v619 = vadd.f32 0.0, %v618
        %620 = vmatmul.bf16.gmra.mxu0 %v506
        %v621 = vpop.f32.mrf.mxu0
        %v622 = vadd.f32 0.0, %v621
        %v623 = vpop.f32.mrf.mxu0
        %v624 = vadd.f32 0.0, %v623
        %625 = vmatmul.bf16.gmra.mxu0 %v509
        %v626 = vpop.f32.mrf.mxu0
        %v627 = vadd.f32 0.0, %v626
        %v628 = vpop.f32.mrf.mxu0
        %v629 = vadd.f32 0.0, %v628
        %630 = vmatmul.bf16.gmra.mxu0 %v512
        %v631 = vpop.f32.mrf.mxu0
        %v632 = vadd.f32 0.0, %v631
        %v633 = vpop.f32.mrf.mxu0
        %v634 = vadd.f32 0.0, %v633
        %635 = vmatmul.bf16.gmra.mxu0 %v515
        %v636 = vpop.f32.mrf.mxu0
        %v637 = vadd.f32 0.0, %v636
        %v638 = vpop.f32.mrf.mxu0
        %v639 = vadd.f32 0.0, %v638
        %640 = vmatmul.bf16.gmra.mxu0 %v518
        %v641 = vpop.f32.mrf.mxu0
        %v642 = vadd.f32 0.0, %v641
        %v643 = vpop.f32.mrf.mxu0
        %v644 = vadd.f32 0.0, %v643
        %645 = vmatmul.bf16.gmra.mxu0 %v521
        %v646 = vpop.f32.mrf.mxu0
        %v647 = vadd.f32 0.0, %v646
        %v648 = vpop.f32.mrf.mxu0
        %v649 = vadd.f32 0.0, %v648
        %650 = vmatmul.bf16.gmra.mxu0 %v524
        %v651 = vpop.f32.mrf.mxu0
        %v652 = vadd.f32 0.0, %v651
        %v653 = vpop.f32.mrf.mxu0
        %v654 = vadd.f32 0.0, %v653
        %655 = vmatmul.bf16.gmra.mxu0 %v527
        %v656 = vpop.f32.mrf.mxu0
        %v657 = vadd.f32 0.0, %v656
        %v658 = vpop.f32.mrf.mxu0
        %v659 = vadd.f32 0.0, %v658
        %660 = vmatmul.bf16.gmra.mxu0 %v530
        %v661 = vpop.f32.mrf.mxu0
        %v662 = vadd.f32 0.0, %v661
        %v663 = vpop.f32.mrf.mxu0
        %v664 = vadd.f32 0.0, %v663
        %665 = vmatmul.bf16.gmra.mxu0 %v533
        %v666 = vpop.f32.mrf.mxu0
        %v667 = vadd.f32 0.0, %v666
        %v668 = vpop.f32.mrf.mxu0
        %v669 = vadd.f32 0.0, %v668
        %670 = vmatmul.bf16.gmra.mxu0 %v536
        %v671 = vpop.f32.mrf.mxu0
        %v672 = vadd.f32 0.0, %v671
        %v673 = vpop.f32.mrf.mxu0
        %v674 = vadd.f32 0.0, %v673
        %675 = vmatmul.bf16.gmra.mxu0 %v539
        %v676 = vpop.f32.mrf.mxu0
        %v677 = vadd.f32 0.0, %v676
        %v678 = vpop.f32.mrf.mxu0
        %v679 = vadd.f32 0.0, %v678
        %680 = vmatmul.bf16.gmra.mxu0 %v542
        %v681 = vpop.f32.mrf.mxu0
        %v682 = vadd.f32 0.0, %v681
        %v683 = vpop.f32.mrf.mxu0
        %v684 = vadd.f32 0.0, %v683
        %685 = vmatmul.bf16.gmra.mxu0 %v545
        %v686 = vpop.f32.mrf.mxu0
        %v687 = vadd.f32 0.0, %v686
        %v688 = vpop.f32.mrf.mxu0
        %v689 = vadd.f32 0.0, %v688
        %690 = vmatmul.bf16.gmra.mxu0 %v548
        %v691 = vpop.f32.mrf.mxu0
        %v692 = vadd.f32 0.0, %v691
        %v693 = vpop.f32.mrf.mxu0
        %v694 = vadd.f32 0.0, %v693
        %695 = vmatmul.bf16.gmra.mxu0 %v551
        %v696 = vpop.f32.mrf.mxu0
        %v697 = vadd.f32 0.0, %v696
        %v698 = vpop.f32.mrf.mxu0
        %v699 = vadd.f32 0.0, %v698
        %700 = vmatmul.bf16.gmra.mxu0 %v554
        %v701 = vpop.f32.mrf.mxu0
        %v702 = vadd.f32 0.0, %v701
        %v703 = vpop.f32.mrf.mxu0
        %v704 = vadd.f32 0.0, %v703
        %705 = vmatmul.bf16.gmra.mxu0 %v557
        %v706 = vpop.f32.mrf.mxu0
        %v707 = vadd.f32 0.0, %v706
        %v708 = vpop.f32.mrf.mxu0
        %v709 = vadd.f32 0.0, %v708
        %710 = vmatmul.bf16.gmra.mxu0 %v560
        %v711 = vpop.f32.mrf.mxu0
        %v712 = vadd.f32 0.0, %v711
        %v713 = vpop.f32.mrf.mxu0
        %v714 = vadd.f32 0.0, %v713
        %715 = vmatmul.bf16.gmra.mxu0 %v563
        %v716 = vpop.f32.mrf.mxu0
        %v717 = vadd.f32 0.0, %v716
        %v718 = vpop.f32.mrf.mxu0
        %v719 = vadd.f32 0.0, %v718
        %720 = vmatmul.bf16.gmra.mxu0 %v566
        %v721 = vpop.f32.mrf.mxu0
        %v722 = vadd.f32 0.0, %v721
        %v723 = vpop.f32.mrf.mxu0
        %v724 = vadd.f32 0.0, %v723
        %725 = vmatmul.bf16.gmra.mxu0 %v569
        %v726 = vpop.f32.mrf.mxu0
        %v727 = vadd.f32 0.0, %v726
        %v728 = vpop.f32.mrf.mxu0
        %v729 = vadd.f32 0.0, %v728
        %730 = vmatmul.bf16.gmra.mxu0 %v572
        %v731 = vpop.f32.mrf.mxu0
        %v732 = vadd.f32 0.0, %v731
        %v733 = vpop.f32.mrf.mxu0
        %v734 = vadd.f32 0.0, %v733
        %735 = vmatmul.bf16.gmra.mxu0 %v575
        %v736 = vpop.f32.mrf.mxu0
        %v737 = vadd.f32 0.0, %v736
        %v738 = vpop.f32.mrf.mxu0
        %v739 = vadd.f32 0.0, %v738
        %740 = vmatmul.bf16.gmra.mxu0 %v578
        %v741 = vpop.f32.mrf.mxu0
        %v742 = vadd.f32 0.0, %v741
        %v743 = vpop.f32.mrf.mxu0
        %v744 = vadd.f32 0.0, %v743
        %745 = vmatmul.bf16.gmra.mxu0 %v581
        %v746 = vpop.f32.mrf.mxu0
        %v747 = vadd.f32 0.0, %v746
        %v748 = vpop.f32.mrf.mxu0
        %v749 = vadd.f32 0.0, %v748
        %750 = vmatmul.bf16.gmra.mxu0 %v584
        %v751 = vpop.f32.mrf.mxu0
        %v752 = vadd.f32 0.0, %v751
        %v753 = vpop.f32.mrf.mxu0
        %v754 = vadd.f32 0.0, %v753
        %755 = vmatmul.bf16.gmra.mxu0 %v587
        %v756 = vpop.f32.mrf.mxu0
        %v757 = vadd.f32 0.0, %v756
        %v758 = vpop.f32.mrf.mxu0
        %v759 = vadd.f32 0.0, %v758
        %760 = vmatmul.bf16.gmra.mxu0 %v590
        %v761 = vpop.f32.mrf.mxu0
        %v762 = vadd.f32 0.0, %v761
        %v763 = vpop.f32.mrf.mxu0
        %v764 = vadd.f32 0.0, %v763
        %765 = vmatmul.bf16.gmra.mxu0 %v593
        %v766 = vpop.f32.mrf.mxu0
        %v767 = vadd.f32 0.0, %v766
        %v768 = vpop.f32.mrf.mxu0
        %v769 = vadd.f32 0.0, %v768
        %770 = vdwg.mxu0
        %v771 = vld [vmem:[%s253] sm:$0x1]
        %v773 = vperm.slane %v771, 0
        %v775 = vmul.f32 %v612, %v773
        %v776 = vmul.f32 %v614, %v773
        %v777 = vmul.f32 %v617, %v773
        %v778 = vmul.f32 %v619, %v773
        %v779 = vmul.f32 %v622, %v773
        %v780 = vmul.f32 %v624, %v773
        %v781 = vmul.f32 %v627, %v773
        %v782 = vmul.f32 %v629, %v773
        %v783 = vmul.f32 %v632, %v773
        %v784 = vmul.f32 %v634, %v773
        %v785 = vmul.f32 %v637, %v773
        %v786 = vmul.f32 %v639, %v773
        %v787 = vmul.f32 %v642, %v773
        %v788 = vmul.f32 %v644, %v773
        %v789 = vmul.f32 %v647, %v773
        %v790 = vmul.f32 %v649, %v773
        %v791 = vmul.f32 %v652, %v773
        %v792 = vmul.f32 %v654, %v773
        %v793 = vmul.f32 %v657, %v773
        %v794 = vmul.f32 %v659, %v773
        %v795 = vmul.f32 %v662, %v773
        %v796 = vmul.f32 %v664, %v773
        %v797 = vmul.f32 %v667, %v773
        %v798 = vmul.f32 %v669, %v773
        %v799 = vmul.f32 %v672, %v773
        %v800 = vmul.f32 %v674, %v773
        %v801 = vmul.f32 %v677, %v773
        %v802 = vmul.f32 %v679, %v773
        %v803 = vmul.f32 %v682, %v773
        %v804 = vmul.f32 %v684, %v773
        %v805 = vmul.f32 %v687, %v773
        %v806 = vmul.f32 %v689, %v773
        %v807 = vmul.f32 %v692, %v773
        %v808 = vmul.f32 %v694, %v773
        %v809 = vmul.f32 %v697, %v773
        %v810 = vmul.f32 %v699, %v773
        %v811 = vmul.f32 %v702, %v773
        %v812 = vmul.f32 %v704, %v773
        %v813 = vmul.f32 %v707, %v773
        %v814 = vmul.f32 %v709, %v773
        %v815 = vmul.f32 %v712, %v773
        %v816 = vmul.f32 %v714, %v773
        %v817 = vmul.f32 %v717, %v773
        %v818 = vmul.f32 %v719, %v773
        %v819 = vmul.f32 %v722, %v773
        %v820 = vmul.f32 %v724, %v773
        %v821 = vmul.f32 %v727, %v773
        %v822 = vmul.f32 %v729, %v773
        %v823 = vmul.f32 %v732, %v773
        %v824 = vmul.f32 %v734, %v773
        %v825 = vmul.f32 %v737, %v773
        %v826 = vmul.f32 %v739, %v773
        %v827 = vmul.f32 %v742, %v773
        %v828 = vmul.f32 %v744, %v773
        %v829 = vmul.f32 %v747, %v773
        %v830 = vmul.f32 %v749, %v773
        %v831 = vmul.f32 %v752, %v773
        %v832 = vmul.f32 %v754, %v773
        %v833 = vmul.f32 %v757, %v773
        %v834 = vmul.f32 %v759, %v773
        %v835 = vmul.f32 %v762, %v773
        %v836 = vmul.f32 %v764, %v773
        %v837 = vmul.f32 %v767, %v773
        %v838 = vmul.f32 %v769, %v773
        %v839 = vld [vmem:[%s256] sm:$0x1]
        %v841 = vperm.slane %v839, 0
        %v843 = vadd.f32 %v775, %v841
        %v844 = vadd.f32 %v776, %v841
        %v845 = vadd.f32 %v777, %v841
        %v846 = vadd.f32 %v778, %v841
        %v847 = vadd.f32 %v779, %v841
        %v848 = vadd.f32 %v780, %v841
        %v849 = vadd.f32 %v781, %v841
        %v850 = vadd.f32 %v782, %v841
        %v851 = vadd.f32 %v783, %v841
        %v852 = vadd.f32 %v784, %v841
        %v853 = vadd.f32 %v785, %v841
        %v854 = vadd.f32 %v786, %v841
        %v855 = vadd.f32 %v787, %v841
        %v856 = vadd.f32 %v788, %v841
        %v857 = vadd.f32 %v789, %v841
        %v858 = vadd.f32 %v790, %v841
        %v859 = vadd.f32 %v791, %v841
        %v860 = vadd.f32 %v792, %v841
        %v861 = vadd.f32 %v793, %v841
        %v862 = vadd.f32 %v794, %v841
        %v863 = vadd.f32 %v795, %v841
        %v864 = vadd.f32 %v796, %v841
        %v865 = vadd.f32 %v797, %v841
        %v866 = vadd.f32 %v798, %v841
        %v867 = vadd.f32 %v799, %v841
        %v868 = vadd.f32 %v800, %v841
        %v869 = vadd.f32 %v801, %v841
        %v870 = vadd.f32 %v802, %v841
        %v871 = vadd.f32 %v803, %v841
        %v872 = vadd.f32 %v804, %v841
        %v873 = vadd.f32 %v805, %v841
        %v874 = vadd.f32 %v806, %v841
        %v875 = vadd.f32 %v807, %v841
        %v876 = vadd.f32 %v808, %v841
        %v877 = vadd.f32 %v809, %v841
        %v878 = vadd.f32 %v810, %v841
        %v879 = vadd.f32 %v811, %v841
        %v880 = vadd.f32 %v812, %v841
        %v881 = vadd.f32 %v813, %v841
        %v882 = vadd.f32 %v814, %v841
        %v883 = vadd.f32 %v815, %v841
        %v884 = vadd.f32 %v816, %v841
        %v885 = vadd.f32 %v817, %v841
        %v886 = vadd.f32 %v818, %v841
        %v887 = vadd.f32 %v819, %v841
        %v888 = vadd.f32 %v820, %v841
        %v889 = vadd.f32 %v821, %v841
        %v890 = vadd.f32 %v822, %v841
        %v891 = vadd.f32 %v823, %v841
        %v892 = vadd.f32 %v824, %v841
        %v893 = vadd.f32 %v825, %v841
        %v894 = vadd.f32 %v826, %v841
        %v895 = vadd.f32 %v827, %v841
        %v896 = vadd.f32 %v828, %v841
        %v897 = vadd.f32 %v829, %v841
        %v898 = vadd.f32 %v830, %v841
        %v899 = vadd.f32 %v831, %v841
        %v900 = vadd.f32 %v832, %v841
        %v901 = vadd.f32 %v833, %v841
        %v902 = vadd.f32 %v834, %v841
        %v903 = vadd.f32 %v835, %v841
        %v904 = vadd.f32 %v836, %v841
        %v905 = vadd.f32 %v837, %v841
        %v906 = vadd.f32 %v838, %v841
        %v907 = vmax.f32 %v843, 0.0
        %v908 = vmax.f32 %v844, 0.0
        %v909 = vmax.f32 %v845, 0.0
        %v910 = vmax.f32 %v846, 0.0
        %v911 = vmax.f32 %v847, 0.0
        %v912 = vmax.f32 %v848, 0.0
        %v913 = vmax.f32 %v849, 0.0
        %v914 = vmax.f32 %v850, 0.0
        %v915 = vmax.f32 %v851, 0.0
        %v916 = vmax.f32 %v852, 0.0
        %v917 = vmax.f32 %v853, 0.0
        %v918 = vmax.f32 %v854, 0.0
        %v919 = vmax.f32 %v855, 0.0
        %v920 = vmax.f32 %v856, 0.0
        %v921 = vmax.f32 %v857, 0.0
        %v922 = vmax.f32 %v858, 0.0
        %v923 = vmax.f32 %v859, 0.0
        %v924 = vmax.f32 %v860, 0.0
        %v925 = vmax.f32 %v861, 0.0
        %v926 = vmax.f32 %v862, 0.0
        %v927 = vmax.f32 %v863, 0.0
        %v928 = vmax.f32 %v864, 0.0
        %v929 = vmax.f32 %v865, 0.0
        %v930 = vmax.f32 %v866, 0.0
        %v931 = vmax.f32 %v867, 0.0
        %v932 = vmax.f32 %v868, 0.0
        %v933 = vmax.f32 %v869, 0.0
        %v934 = vmax.f32 %v870, 0.0
        %v935 = vmax.f32 %v871, 0.0
        %v936 = vmax.f32 %v872, 0.0
        %v937 = vmax.f32 %v873, 0.0
        %v938 = vmax.f32 %v874, 0.0
        %v939 = vmax.f32 %v875, 0.0
        %v940 = vmax.f32 %v876, 0.0
        %v941 = vmax.f32 %v877, 0.0
        %v942 = vmax.f32 %v878, 0.0
        %v943 = vmax.f32 %v879, 0.0
        %v944 = vmax.f32 %v880, 0.0
        %v945 = vmax.f32 %v881, 0.0
        %v946 = vmax.f32 %v882, 0.0
        %v947 = vmax.f32 %v883, 0.0
        %v948 = vmax.f32 %v884, 0.0
        %v949 = vmax.f32 %v885, 0.0
        %v950 = vmax.f32 %v886, 0.0
        %v951 = vmax.f32 %v887, 0.0
        %v952 = vmax.f32 %v888, 0.0
        %v953 = vmax.f32 %v889, 0.0
        %v954 = vmax.f32 %v890, 0.0
        %v955 = vmax.f32 %v891, 0.0
        %v956 = vmax.f32 %v892, 0.0
        %v957 = vmax.f32 %v893, 0.0
        %v958 = vmax.f32 %v894, 0.0
        %v959 = vmax.f32 %v895, 0.0
        %v960 = vmax.f32 %v896, 0.0
        %v961 = vmax.f32 %v897, 0.0
        %v962 = vmax.f32 %v898, 0.0
        %v963 = vmax.f32 %v899, 0.0
        %v964 = vmax.f32 %v900, 0.0
        %v965 = vmax.f32 %v901, 0.0
        %v966 = vmax.f32 %v902, 0.0
        %v967 = vmax.f32 %v903, 0.0
        %v968 = vmax.f32 %v904, 0.0
        %v969 = vmax.f32 %v905, 0.0
        %v970 = vmax.f32 %v906, 0.0
        %v971 = vpack.c.bf16 %v907, %v907
        %v972 = vpack.c.bf16 %v908, %v908
        %v973 = vpack.c.bf16 %v909, %v909
        %v974 = vpack.c.bf16 %v910, %v910
        %v975 = vpack.c.bf16 %v911, %v911
        %v976 = vpack.c.bf16 %v912, %v912
        %v977 = vpack.c.bf16 %v913, %v913
        %v978 = vpack.c.bf16 %v914, %v914
        %v979 = vpack.c.bf16 %v915, %v915
        %v980 = vpack.c.bf16 %v916, %v916
        %v981 = vpack.c.bf16 %v917, %v917
        %v982 = vpack.c.bf16 %v918, %v918
        %v983 = vpack.c.bf16 %v919, %v919
        %v984 = vpack.c.bf16 %v920, %v920
        %v985 = vpack.c.bf16 %v921, %v921
        %v986 = vpack.c.bf16 %v922, %v922
        %v987 = vpack.c.bf16 %v923, %v923
        %v988 = vpack.c.bf16 %v924, %v924
        %v989 = vpack.c.bf16 %v925, %v925
        %v990 = vpack.c.bf16 %v926, %v926
        %v991 = vpack.c.bf16 %v927, %v927
        %v992 = vpack.c.bf16 %v928, %v928
        %v993 = vpack.c.bf16 %v929, %v929
        %v994 = vpack.c.bf16 %v930, %v930
        %v995 = vpack.c.bf16 %v931, %v931
        %v996 = vpack.c.bf16 %v932, %v932
        %v997 = vpack.c.bf16 %v933, %v933
        %v998 = vpack.c.bf16 %v934, %v934
        %v999 = vpack.c.bf16 %v935, %v935
        %v1000 = vpack.c.bf16 %v936, %v936
        %v1001 = vpack.c.bf16 %v937, %v937
        %v1002 = vpack.c.bf16 %v938, %v938
        %v1003 = vpack.c.bf16 %v939, %v939
        %v1004 = vpack.c.bf16 %v940, %v940
        %v1005 = vpack.c.bf16 %v941, %v941
        %v1006 = vpack.c.bf16 %v942, %v942
        %v1007 = vpack.c.bf16 %v943, %v943
        %v1008 = vpack.c.bf16 %v944, %v944
        %v1009 = vpack.c.bf16 %v945, %v945
        %v1010 = vpack.c.bf16 %v946, %v946
        %v1011 = vpack.c.bf16 %v947, %v947
        %v1012 = vpack.c.bf16 %v948, %v948
        %v1013 = vpack.c.bf16 %v949, %v949
        %v1014 = vpack.c.bf16 %v950, %v950
        %v1015 = vpack.c.bf16 %v951, %v951
        %v1016 = vpack.c.bf16 %v952, %v952
        %v1017 = vpack.c.bf16 %v953, %v953
        %v1018 = vpack.c.bf16 %v954, %v954
        %v1019 = vpack.c.bf16 %v955, %v955
        %v1020 = vpack.c.bf16 %v956, %v956
        %v1021 = vpack.c.bf16 %v957, %v957
        %v1022 = vpack.c.bf16 %v958, %v958
        %v1023 = vpack.c.bf16 %v959, %v959
        %v1024 = vpack.c.bf16 %v960, %v960
        %v1025 = vpack.c.bf16 %v961, %v961
        %v1026 = vpack.c.bf16 %v962, %v962
        %v1027 = vpack.c.bf16 %v963, %v963
        %v1028 = vpack.c.bf16 %v964, %v964
        %v1029 = vpack.c.bf16 %v965, %v965
        %v1030 = vpack.c.bf16 %v966, %v966
        %v1031 = vpack.c.bf16 %v967, %v967
        %v1032 = vpack.c.bf16 %v968, %v968
        %v1033 = vpack.c.bf16 %v969, %v969
        %v1034 = vpack.c.bf16 %v970, %v970
        %1035 = vst [vmem:[%s240] sm:$0xf] %v971
        %1036 = vst [vmem:[%s240 + $0x4] sm:$0xf] %v972
        %1037 = vst [vmem:[%s240 + $0x8] sm:$0xf] %v973
        %1038 = vst [vmem:[%s240 + $0xc] sm:$0xf] %v974
        %1039 = vst [vmem:[%s240 + $0x10] sm:$0xf] %v975
        %1040 = vst [vmem:[%s240 + $0x14] sm:$0xf] %v976
        %1041 = vst [vmem:[%s240 + $0x18] sm:$0xf] %v977
        %1042 = vst [vmem:[%s240 + $0x1c] sm:$0xf] %v978
        %1043 = vst [vmem:[%s240 + $0x20] sm:$0xf] %v979
        %1044 = vst [vmem:[%s240 + $0x24] sm:$0xf] %v980
        %1045 = vst [vmem:[%s240 + $0x28] sm:$0xf] %v981
        %1046 = vst [vmem:[%s240 + $0x2c] sm:$0xf] %v982
        %1047 = vst [vmem:[%s240 + $0x30] sm:$0xf] %v983
        %1048 = vst [vmem:[%s240 + $0x34] sm:$0xf] %v984
        %1049 = vst [vmem:[%s240 + $0x38] sm:$0xf] %v985
        %1050 = vst [vmem:[%s240 + $0x3c] sm:$0xf] %v986
        %1051 = vst [vmem:[%s240 + $0x40] sm:$0xf] %v987
        %1052 = vst [vmem:[%s240 + $0x44] sm:$0xf] %v988
        %1053 = vst [vmem:[%s240 + $0x48] sm:$0xf] %v989
        %1054 = vst [vmem:[%s240 + $0x4c] sm:$0xf] %v990
        %1055 = vst [vmem:[%s240 + $0x50] sm:$0xf] %v991
        %1056 = vst [vmem:[%s240 + $0x54] sm:$0xf] %v992
        %1057 = vst [vmem:[%s240 + $0x58] sm:$0xf] %v993
        %1058 = vst [vmem:[%s240 + $0x5c] sm:$0xf] %v994
        %1059 = vst [vmem:[%s240 + $0x60] sm:$0xf] %v995
        %1060 = vst [vmem:[%s240 + $0x64] sm:$0xf] %v996
        %1061 = vst [vmem:[%s240 + $0x68] sm:$0xf] %v997
        %1062 = vst [vmem:[%s240 + $0x6c] sm:$0xf] %v998
        %1063 = vst [vmem:[%s240 + $0x70] sm:$0xf] %v999
        %1064 = vst [vmem:[%s240 + $0x74] sm:$0xf] %v1000
        %1065 = vst [vmem:[%s240 + $0x78] sm:$0xf] %v1001
        %1066 = vst [vmem:[%s240 + $0x7c] sm:$0xf] %v1002
        %1067 = vst [vmem:[%s240 + $0x80] sm:$0xf] %v1003
        %1068 = vst [vmem:[%s240 + $0x84] sm:$0xf] %v1004
        %1069 = vst [vmem:[%s240 + $0x88] sm:$0xf] %v1005
        %1070 = vst [vmem:[%s240 + $0x8c] sm:$0xf] %v1006
        %1071 = vst [vmem:[%s240 + $0x90] sm:$0xf] %v1007
        %1072 = vst [vmem:[%s240 + $0x94] sm:$0xf] %v1008
        %1073 = vst [vmem:[%s240 + $0x98] sm:$0xf] %v1009
        %1074 = vst [vmem:[%s240 + $0x9c] sm:$0xf] %v1010
        %1075 = vst [vmem:[%s240 + $0xa0] sm:$0xf] %v1011
        %1076 = vst [vmem:[%s240 + $0xa4] sm:$0xf] %v1012
        %1077 = vst [vmem:[%s240 + $0xa8] sm:$0xf] %v1013
        %1078 = vst [vmem:[%s240 + $0xac] sm:$0xf] %v1014
        %1079 = vst [vmem:[%s240 + $0xb0] sm:$0xf] %v1015
        %1080 = vst [vmem:[%s240 + $0xb4] sm:$0xf] %v1016
        %1081 = vst [vmem:[%s240 + $0xb8] sm:$0xf] %v1017
        %1082 = vst [vmem:[%s240 + $0xbc] sm:$0xf] %v1018
        %1083 = vst [vmem:[%s240 + $0xc0] sm:$0xf] %v1019
        %1084 = vst [vmem:[%s240 + $0xc4] sm:$0xf] %v1020
        %1085 = vst [vmem:[%s240 + $0xc8] sm:$0xf] %v1021
        %1086 = vst [vmem:[%s240 + $0xcc] sm:$0xf] %v1022
        %1087 = vst [vmem:[%s240 + $0xd0] sm:$0xf] %v1023
        %1088 = vst [vmem:[%s240 + $0xd4] sm:$0xf] %v1024
        %1089 = vst [vmem:[%s240 + $0xd8] sm:$0xf] %v1025
        %1090 = vst [vmem:[%s240 + $0xdc] sm:$0xf] %v1026
        %1091 = vst [vmem:[%s240 + $0xe0] sm:$0xf] %v1027
        %1092 = vst [vmem:[%s240 + $0xe4] sm:$0xf] %v1028
        %1093 = vst [vmem:[%s240 + $0xe8] sm:$0xf] %v1029
        %1094 = vst [vmem:[%s240 + $0xec] sm:$0xf] %v1030
        %1095 = vst [vmem:[%s240 + $0xf0] sm:$0xf] %v1031
        %1096 = vst [vmem:[%s240 + $0xf4] sm:$0xf] %v1032
        %1097 = vst [vmem:[%s240 + $0xf8] sm:$0xf] %v1033
        %1098 = vst [vmem:[%s240 + $0xfc] sm:$0xf] %v1034
        %s1099 = sand.u32 %s144, 1
        %s1100 = scalar_lea.sflag [#allocation3], %s1099
        %s1101 = sand.u32 %s144, 1
        %s1102 = smul.addr %s1101, 256
        %s1103 = scalar_lea.vmem [#allocation2], %s1102
        // Predicated region
        $region37: #{_conv_fallback.1} parent=35 // pred_check
          %p1104 = pneg %p154
        $region38: #{_conv_fallback.1} parent=35 // pred_check_branch
          %1106 = sbr.rel (%p1104) target = $region40
        $region39: #{_conv_fallback.1} parent=35 // pred_region
          %s1107 = smul.u32 64, %s22
          %1109 = vsyncadd %s1100, 0
          %s1110 = sadd.s32 %s23, %s1107
          %s1111 = smul.addr %s1110, 4
          %s1112 = scalar_lea.hbm %s4, %s1111
          %s1113 = sshll.u32 %s1103, 4
          %s1114 = int_to_ptr.vmem [resolvable:$true] %s1113
          %s1115 = sshll.u32 %s1112, 4
          %s1116 = int_to_ptr.hbm [resolvable:$true] %s1115
          %1121 = dma.vmem_to_hbm [thread:$0]  %s1114, 4096, %s1116, %s1100, 64, 64, 4
        $region40: #{_conv_fallback.1} parent=35 // pred_fallthru
          _
      $region36: #{_conv_fallback.1} parent=5 // pred_fallthru
        _
      %p1122 = scmp.le.s32.totalorder 2, %s13
      // Predicated region
      $region41: #{_conv_fallback.1} parent=5 // pred_check
        %p1123 = pneg %p1122
      $region42: #{_conv_fallback.1} parent=5 // pred_check_branch
        %1125 = sbr.rel (%p1123) target = $region44
      $region43: #{_conv_fallback.1} parent=5 // pred_region
        %s1126 = ssub.s32 %s13, 2
        // Predicated region
        $region45: #{_conv_fallback.1} parent=43 // pred_check
          %p1127 = pneg %p160
        $region46: #{_conv_fallback.1} parent=43 // pred_check_branch
          %1129 = sbr.rel (%p1127) target = $region48
        $region47: #{_conv_fallback.1} parent=43 // pred_region
          %s1130 = sand.u32 %s145, 1
          %s1131 = scalar_lea.sflag [#allocation3], %s1130
          %s1132 = sand.u32 %s145, 1
          %s1133 = smul.addr %s1132, 256
          %s1134 = scalar_lea.vmem [#allocation2], %s1133
          %1136 = dma.done %s1131, 4096
        $region48: #{_conv_fallback.1} parent=43 // pred_fallthru
          _
      $region44: #{_conv_fallback.1} parent=5 // pred_fallthru
        _
    $region6: #{_conv_fallback.1} parent=1 // loop_footer
      %s17 = sadd.s32 1, %s13
    $region7: #{_conv_fallback.1} parent=1 // loop_footer_branch
      %12 = sbr.rel target = $region3
    $region8: #{_conv_fallback.1} parent=1 // loop_exit
      _
    %1137 = vsyncpa [#allocation3], 1
    %s1138 = scalar_lea.sflag [#allocation3], 1
    %1139 = vsyncpa %s1138, 1

</llo_original>
